<compile_context>
chip_gen: v5e
topology: v5e:2x2
jax: 0.10.0
libtpu: 0.0.40
codegen_flags: <defaults>
</compile_context>

<pallas_src>
import functools

import jax
import jax.numpy as jnp
from jax import lax
from jax.experimental import pallas as pl
from jax.experimental.pallas import tpu as pltpu


def _mononet_kernel(x_ref, lo_ref, hi_ref, wi_ref, bi_ref, wh_ref, bh_ref,
                    wf_ref, bf_ref, o_ref, *, n_layers, compute_dtype):
    """One batch tile.  Hidden activations are (features, tile_b): batch on lanes."""
    # Per-feature clamp bounds, loaded once per grid step and shared by all layers.
    lo = lo_ref[...]                                   # (H, 1) f32
    hi = hi_ref[...]                                   # (H, 1) f32

    # ---- input layer -----------------------------------------------------------
    # x tile arrives in natural (tile_b, n_in) layout; contract over n_in so the
    # result lands transposed (H, tile_b) with the batch on the 128 lanes.
    x = x_ref[...].astype(compute_dtype)
    z = lax.dot_general(wi_ref[...], x, (((1,), (1,)), ((), ())),
                        preferred_element_type=jnp.float32)
    z = z + bi_ref[...]                                # (H, tb) + (H, 1)
    h = jnp.minimum(jnp.maximum(z, lo), hi).astype(compute_dtype)

    # ---- hidden layers (weights already |W| from the wrapper) -------------------
    def body(l, h):
        zz = jnp.dot(wh_ref[l], h, preferred_element_type=jnp.float32) + bh_ref[l]
        return jnp.minimum(jnp.maximum(zz, lo), hi).astype(compute_dtype)

    h = lax.fori_loop(0, n_layers, body, h, unroll=(n_layers <= 8))

    # ---- output layer H -> 1: VPU multiply + sublane (XLU) reduction ------------
    # An N=1 MXU matmul would waste 127/128 of the array; this also yields a
    # lane-dense (1, tile_b) result -> unmasked vst.
    wf = wf_ref[...]                                   # (H, 1) f32
    out = jnp.sum(wf * h.astype(jnp.float32), axis=0, keepdims=True)  # (1, tb)
    o_ref[...] = out + bf_ref[...]


def mononet_forward(x, params, monotonicity_indicator, *,
                    activation_weights=(1.0, 1.0, 1.0),
                    tile_b=None, compute_dtype=None,
                    weight_buffer_count=None):
    """MonoNet forward: monotonic_i -> act -> [monotonic -> act]*n_layers -> monotonic_f.

    params are in PyTorch nn.Linear orientation:
      wi (H, n_in), bi (H,), wh (L, H, H), bh (L, H), wf (1, H), bf (1,)
    """
    wi, bi, wh, bh, wf, bf = params
    B, n_inputs = x.shape
    n_layers, H, _ = wh.shape
    assert n_layers >= 1
    assert wi.shape == (H, n_inputs) and wf.shape == (1, H)

    # dtype fed to the MXU: f32 for small H (MXU is <10% utilized anyway and the
    # v5e VPU has no bf16 -> per-layer pack/unpack is pure overhead); bf16 otherwise.
    if compute_dtype is None:
        compute_dtype = jnp.float32 if H <= 128 else jnp.bfloat16

    # Static activation split (mirrors MonotonicActivation.forward, Python round()).
    total = activation_weights[0] + activation_weights[1] + activation_weights[2]
    s_convex = round(activation_weights[0] * H / total)
    s_concave = round(activation_weights[1] * H / total)

    # Per-feature clamp bounds: convex ReLU = clamp(x, 0, inf); concave -ReLU(-x) =
    # clamp(x, -inf, 0); saturated (ReLU) = clamp(x, -1, 1).  Built once per call.
    row = jnp.arange(H)
    lo = jnp.where(row < s_convex, 0.0,
                   jnp.where(row < s_convex + s_concave, -jnp.inf, -1.0))
    hi = jnp.where(row < s_convex, jnp.inf,
                   jnp.where(row < s_convex + s_concave, 0.0, 1.0))
    lo = lo.reshape(H, 1).astype(jnp.float32)
    hi = hi.reshape(H, 1).astype(jnp.float32)

    # Constant-per-call weight transforms hoisted out of the kernel.
    mono = jnp.asarray(monotonicity_indicator, jnp.float32).reshape(1, n_inputs)
    aw = jnp.abs(wi)
    wi_eff = jnp.where(mono == 1.0, aw, wi)
    wi_eff = jnp.where(mono == -1.0, -aw, wi_eff).astype(compute_dtype)
    wh_abs = jnp.abs(wh).astype(compute_dtype)          # all-ones indicator -> |W|
    bi_c = bi.reshape(H, 1).astype(jnp.float32)
    bh_c = bh.reshape(n_layers, H, 1).astype(jnp.float32)
    wf_c = jnp.abs(wf).reshape(H, 1).astype(jnp.float32)  # stays f32: VPU path
    bf_c = bf.reshape(1, 1).astype(jnp.float32)

    # Batch tile: multiple of 128 lanes, grown up to 2048 while keeping >= 2 grid
    # steps (fixed per-grid-step cost ~0.35us dominates at small tiles).  Nudge the
    # step count to be even where cheap so v7x's two TensorCores split it evenly.
    if tile_b is None:
        tile_b = 128
        while tile_b < 2048 and B >= 4 * tile_b:
            tile_b *= 2
        n_steps = pl.cdiv(B, tile_b)
        if (n_steps > 1 and n_steps % 2 == 1 and tile_b < 2048
                and pl.cdiv(B, 2 * tile_b) % 2 == 0):
            tile_b *= 2
    assert tile_b % 128 == 0, "tile_b must be a multiple of 128 lanes"
    b_pad = pl.cdiv(B, tile_b) * tile_b
    grid = (b_pad // tile_b,)

    # Keep x in its natural (B, n_in) layout/dtype: no wrapper transpose/cast pass.
    # Pad only if the batch is ragged (rows are independent; pad rows are sliced off).
    x_in = x if b_pad == B else jnp.pad(x, ((0, b_pad - B), (0, 0)))

    # Resident weight footprint (constant index maps keep them in VMEM).
    w_item = jnp.dtype(compute_dtype).itemsize
    w_bytes = ((wi_eff.size + wh_abs.size) * w_item
               + (bi_c.size + bh_c.size + wf_c.size + bf_c.size
                  + lo.size + hi.size) * 4)
    # Single-buffer weights only when they are big enough to threaten VMEM
    # (mainly v7x's 64 MiB); small configs keep default pipelining.
    if weight_buffer_count is None:
        weight_buffer_count = 1 if w_bytes > 8 * 2**20 else 2
    w_bufs = weight_buffer_count

    def w_spec(shape, imap):
        if w_bufs == 2:
            return pl.BlockSpec(shape, imap)
        return pl.BlockSpec(shape, imap, pipeline_mode=pl.Buffered(w_bufs))

    # Explicit VMEM budget, clamped to the actual device capacity (minus headroom)
    # so the limit is legal on v7x (64 MiB) as well as v5e/v6e (128 MiB).
    est = (2 * tile_b * n_inputs * x.dtype.itemsize   # x tile, double-buffered
           + 2 * tile_b * 4                           # output tile, double-buffered
           + w_bufs * w_bytes)                        # resident weights
    try:
        vmem_cap = int(getattr(pltpu.get_tpu_info(), "vmem_capacity_bytes",
                               64 * 2**20))
    except Exception:
        vmem_cap = 64 * 2**20
    ceiling = max(32 * 2**20, vmem_cap - 8 * 2**20)
    vmem_limit = int(min(ceiling, max(32 * 2**20, 4 * est)))

    kernel = functools.partial(_mononet_kernel, n_layers=n_layers,
                               compute_dtype=compute_dtype)

    grid_spec = pltpu.PrefetchScalarGridSpec(
        num_scalar_prefetch=0,
        grid=grid,
        in_specs=[
            pl.BlockSpec((tile_b, n_inputs), lambda i: (i, 0)),   # x tile (natural)
            w_spec((H, 1), lambda i: (0, 0)),                     # activation lo
            w_spec((H, 1), lambda i: (0, 0)),                     # activation hi
            w_spec((H, n_inputs), lambda i: (0, 0)),              # W_i (mono applied)
            w_spec((H, 1), lambda i: (0, 0)),                     # b_i
            w_spec((n_layers, H, H), lambda i: (0, 0, 0)),        # |W_h| stack
            w_spec((n_layers, H, 1), lambda i: (0, 0, 0)),        # b_h stack
            w_spec((H, 1), lambda i: (0, 0)),                     # |W_f| column
            w_spec((1, 1), lambda i: (0, 0)),                     # b_f
        ],
        out_specs=pl.BlockSpec((1, tile_b), lambda i: (0, i)),    # lane-dense output
    )

    out_t = pl.pallas_call(
        kernel,
        out_shape=jax.ShapeDtypeStruct((1, b_pad), jnp.float32),
        grid_spec=grid_spec,
        compiler_params=pltpu.CompilerParams(
            dimension_semantics=("parallel",),
            vmem_limit_bytes=vmem_limit),
    )(x_in, lo, hi, wi_eff, bi_c, wh_abs, bh_c, wf_c, bf_c)

    # layout plumbing back to the PyTorch (B, 1) output
    return out_t[0, :B].reshape(B, 1)


# ----------------------------- pure-JAX reference -----------------------------

def _apply_mono(w, m):
    aw = jnp.abs(w)
    wt = jnp.where(m == 1, aw, w)
    return jnp.where(m == -1, -aw, wt)


def _monotonic_activation_ref(h, activation_weights=(1.0, 1.0, 1.0)):
    units = h.shape[1]
    total = activation_weights[0] + activation_weights[1] + activation_weights[2]
    s_cx = round(activation_weights[0] * units / total)
    s_cc = round(activation_weights[1] * units / total)
    x_cx, x_cc, x_sat = h[:, :s_cx], h[:, s_cx:s_cx + s_cc], h[:, s_cx + s_cc:]
    y_cx = jnp.maximum(x_cx, 0.0)
    y_cc = -jnp.maximum(-x_cc, 0.0)
    y_sat = jnp.where(x_sat <= 0.0,
                      jnp.maximum(x_sat + 1.0, 0.0) - 1.0,
                      1.0 - jnp.maximum(1.0 - x_sat, 0.0))
    return jnp.concatenate([y_cx, y_cc, y_sat], axis=-1)


def mononet_forward_ref(x, params, monotonicity_indicator, *,
                        activation_weights=(1.0, 1.0, 1.0), quant_dtype=None):
    """Mirror of PyTorch MonoNet.forward.  If quant_dtype is set, weights and
    activations are quantized at the same points as the kernel (f32 accumulation)
    for a tight check of the low-precision path."""
    wi, bi, wh, bh, wf, bf = params
    q = (lambda a: a) if quant_dtype is None else (
        lambda a: a.astype(quant_dtype).astype(jnp.float32))
    h = q(x) @ q(_apply_mono(wi, monotonicity_indicator)).T + bi
    h = q(_monotonic_activation_ref(h, activation_weights))
    for l in range(wh.shape[0]):
        h = h @ q(jnp.abs(wh[l])).T + bh[l]
        h = q(_monotonic_activation_ref(h, activation_weights))
    return h @ jnp.abs(wf).T + bf


def init_params(key, n_inputs, n_layers, hidden_size):
    """nn.Linear-style U(-1/sqrt(fan_in), 1/sqrt(fan_in)) in PyTorch orientation."""
    ks = jax.random.split(key, 6)

    def unif(k, shape, fan_in):
        bound = 1.0 / jnp.sqrt(jnp.float32(fan_in))
        return jax.random.uniform(k, shape, jnp.float32, -bound, bound)

    wi = unif(ks[0], (hidden_size, n_inputs), n_inputs)
    bi = unif(ks[1], (hidden_size,), n_inputs)
    wh = unif(ks[2], (n_layers, hidden_size, hidden_size), hidden_size)
    bh = unif(ks[3], (n_layers, hidden_size), hidden_size)
    wf = unif(ks[4], (1, hidden_size), hidden_size)
    bf = unif(ks[5], (1,), hidden_size)
    return wi, bi, wh, bh, wf, bf


if __name__ == "__main__":
    batch = 200            # ragged: padded to 256 -> grid of 2 x 128-row tiles
    n_inputs = 32
    n_layers = 2
    hidden_size = 32

    key = jax.random.PRNGKey(0)
    kx, kp = jax.random.split(key)
    x = jax.random.normal(kx, (batch, n_inputs), jnp.float32)
    params = init_params(kp, n_inputs, n_layers, hidden_size)
    # mixed monotonicity: increasing in the first 10 inputs, decreasing in the
    # next 10, unconstrained in the rest
    mono = jnp.concatenate(
        [jnp.ones(10), -jnp.ones(10), jnp.zeros(n_inputs - 20)]).astype(jnp.float32)

    ref = mononet_forward_ref(x, params, mono)

    # Default path (f32 compute for small H): exact semantics of the PyTorch module.
    out_f32 = jax.block_until_ready(mononet_forward(x, params, mono))
    assert out_f32.shape == (batch, 1), out_f32.shape
    assert jnp.allclose(out_f32, ref, atol=5e-4, rtol=5e-4), \
        float(jnp.max(jnp.abs(out_f32 - ref)))

    # bf16 MXU path (for large-H configs): f32 accumulation; tight check vs a
    # precision-matched reference + loose sanity bound vs the f32 module.
    out_bf16 = jax.block_until_ready(
        mononet_forward(x, params, mono, compute_dtype=jnp.bfloat16))
    ref_bf16 = mononet_forward_ref(x, params, mono, quant_dtype=jnp.bfloat16)
    assert out_bf16.shape == (batch, 1), out_bf16.shape
    assert jnp.allclose(out_bf16, ref_bf16, atol=1e-3, rtol=1e-3), \
        float(jnp.max(jnp.abs(out_bf16 - ref_bf16)))
    assert float(jnp.max(jnp.abs(out_bf16 - ref))) < 0.2

    print("KERNEL_OK")
</pallas_src>

<mosaic_0001>
module attributes {stable_mosaic.version = 11 : i64} {
  func.func @_mononet_kernel(%arg0: i32, %arg1: memref<128x32xf32, #tpu.memory_space<vmem>>, %arg2: memref<32x1xf32, #tpu.memory_space<vmem>>, %arg3: memref<32x1xf32, #tpu.memory_space<vmem>>, %arg4: memref<32x32xf32, #tpu.memory_space<vmem>>, %arg5: memref<32x1xf32, #tpu.memory_space<vmem>>, %arg6: memref<2x32x32xf32, #tpu.memory_space<vmem>>, %arg7: memref<2x32x1xf32, #tpu.memory_space<vmem>>, %arg8: memref<32x1xf32, #tpu.memory_space<vmem>>, %arg9: memref<1x1xf32, #tpu.memory_space<vmem>>, %arg10: memref<1x128xf32, #tpu.memory_space<vmem>>) attributes {dimension_semantics = [#tpu.dimension_semantics<parallel>], iteration_bounds = array<i64: 2>, scalar_prefetch = 0 : i64, scratch_operands = 0 : i64, tpu.core_type = #tpu.core_type<tc>, window_params = [{transform_indices = @transform_0, window_bounds = array<i64: 128, 32>}, {pipeline_mode = #tpu.pipeline_mode<synchronous>, transform_indices = @transform_1, window_bounds = array<i64: 32, 1>}, {pipeline_mode = #tpu.pipeline_mode<synchronous>, transform_indices = @transform_2, window_bounds = array<i64: 32, 1>}, {pipeline_mode = #tpu.pipeline_mode<synchronous>, transform_indices = @transform_3, window_bounds = array<i64: 32, 32>}, {pipeline_mode = #tpu.pipeline_mode<synchronous>, transform_indices = @transform_4, window_bounds = array<i64: 32, 1>}, {pipeline_mode = #tpu.pipeline_mode<synchronous>, transform_indices = @transform_5, window_bounds = array<i64: 2, 32, 32>}, {pipeline_mode = #tpu.pipeline_mode<synchronous>, transform_indices = @transform_6, window_bounds = array<i64: 2, 32, 1>}, {pipeline_mode = #tpu.pipeline_mode<synchronous>, transform_indices = @transform_7, window_bounds = array<i64: 32, 1>}, {pipeline_mode = #tpu.pipeline_mode<synchronous>, transform_indices = @transform_8, window_bounds = array<i64: 1, 1>}, {transform_indices = @transform_9, window_bounds = array<i64: 1, 128>}]} {
    %c0 = arith.constant 0 : index
    %c0_0 = arith.constant 0 : index
    %0 = vector.load %arg2[%c0, %c0_0] : memref<32x1xf32, #tpu.memory_space<vmem>>, vector<32x1xf32>
    %c0_1 = arith.constant 0 : index
    %c0_2 = arith.constant 0 : index
    %1 = vector.load %arg3[%c0_1, %c0_2] : memref<32x1xf32, #tpu.memory_space<vmem>>, vector<32x1xf32>
    %c0_3 = arith.constant 0 : index
    %c0_4 = arith.constant 0 : index
    %2 = vector.load %arg1[%c0_3, %c0_4] : memref<128x32xf32, #tpu.memory_space<vmem>>, vector<128x32xf32>
    %c0_5 = arith.constant 0 : index
    %c0_6 = arith.constant 0 : index
    %3 = vector.load %arg4[%c0_5, %c0_6] : memref<32x32xf32, #tpu.memory_space<vmem>>, vector<32x32xf32>
    %cst = arith.constant dense<0.000000e+00> : vector<32x128xf32>
    %4 = tpu.matmul %3, %2, %cst {dimension_numbers = #tpu.dot_dimension_numbers<[1], [1], [0], [0], [0, 0, 1, 0], [], []>} : vector<32x32xf32>, vector<128x32xf32>, vector<32x128xf32> -> vector<32x128xf32>
    %c0_7 = arith.constant 0 : index
    %c0_8 = arith.constant 0 : index
    %5 = vector.load %arg5[%c0_7, %c0_8] : memref<32x1xf32, #tpu.memory_space<vmem>>, vector<32x1xf32>
    %6 = vector.broadcast %5 : vector<32x1xf32> to vector<32x128xf32>
    %7 = arith.addf %4, %6 : vector<32x128xf32>
    %8 = vector.broadcast %0 : vector<32x1xf32> to vector<32x128xf32>
    %9 = arith.maximumf %7, %8 : vector<32x128xf32>
    %10 = vector.broadcast %1 : vector<32x1xf32> to vector<32x128xf32>
    %11 = arith.minimumf %9, %10 : vector<32x128xf32>
    %c0_i32 = arith.constant 0 : i32
    %12 = arith.index_cast %c0_i32 : i32 to index
    %c0_9 = arith.constant 0 : index
    %c0_10 = arith.constant 0 : index
    %13 = vector.load %arg6[%12, %c0_9, %c0_10] : memref<2x32x32xf32, #tpu.memory_space<vmem>>, vector<1x32x32xf32>
    %14 = vector.shape_cast %13 : vector<1x32x32xf32> to vector<32x32xf32>
    %cst_11 = arith.constant dense<0.000000e+00> : vector<32x128xf32>
    %15 = tpu.matmul %14, %11, %cst_11 {dimension_numbers = #tpu.dot_dimension_numbers<[1], [0], [0], [1], [0, 0, 1, 1], [], []>} : vector<32x32xf32>, vector<32x128xf32>, vector<32x128xf32> -> vector<32x128xf32>
    %16 = arith.index_cast %c0_i32 : i32 to index
    %c0_12 = arith.constant 0 : index
    %c0_13 = arith.constant 0 : index
    %17 = vector.load %arg7[%16, %c0_12, %c0_13] : memref<2x32x1xf32, #tpu.memory_space<vmem>>, vector<1x32x1xf32>
    %18 = vector.shape_cast %17 : vector<1x32x1xf32> to vector<32x1xf32>
    %19 = vector.broadcast %18 : vector<32x1xf32> to vector<32x128xf32>
    %20 = arith.addf %15, %19 : vector<32x128xf32>
    %21 = vector.broadcast %0 : vector<32x1xf32> to vector<32x128xf32>
    %22 = arith.maximumf %20, %21 : vector<32x128xf32>
    %23 = vector.broadcast %1 : vector<32x1xf32> to vector<32x128xf32>
    %24 = arith.minimumf %22, %23 : vector<32x128xf32>
    %c1_i32 = arith.constant 1 : i32
    %25 = arith.index_cast %c1_i32 : i32 to index
    %c0_14 = arith.constant 0 : index
    %c0_15 = arith.constant 0 : index
    %26 = vector.load %arg6[%25, %c0_14, %c0_15] : memref<2x32x32xf32, #tpu.memory_space<vmem>>, vector<1x32x32xf32>
    %27 = vector.shape_cast %26 : vector<1x32x32xf32> to vector<32x32xf32>
    %cst_16 = arith.constant dense<0.000000e+00> : vector<32x128xf32>
    %28 = tpu.matmul %27, %24, %cst_16 {dimension_numbers = #tpu.dot_dimension_numbers<[1], [0], [0], [1], [0, 0, 1, 1], [], []>} : vector<32x32xf32>, vector<32x128xf32>, vector<32x128xf32> -> vector<32x128xf32>
    %29 = arith.index_cast %c1_i32 : i32 to index
    %c0_17 = arith.constant 0 : index
    %c0_18 = arith.constant 0 : index
    %30 = vector.load %arg7[%29, %c0_17, %c0_18] : memref<2x32x1xf32, #tpu.memory_space<vmem>>, vector<1x32x1xf32>
    %31 = vector.shape_cast %30 : vector<1x32x1xf32> to vector<32x1xf32>
    %32 = vector.broadcast %31 : vector<32x1xf32> to vector<32x128xf32>
    %33 = arith.addf %28, %32 : vector<32x128xf32>
    %34 = vector.broadcast %0 : vector<32x1xf32> to vector<32x128xf32>
    %35 = arith.maximumf %33, %34 : vector<32x128xf32>
    %36 = vector.broadcast %1 : vector<32x1xf32> to vector<32x128xf32>
    %37 = arith.minimumf %35, %36 : vector<32x128xf32>
    %c2_i32 = arith.constant 2 : i32
    %c0_19 = arith.constant 0 : index
    %c0_20 = arith.constant 0 : index
    %38 = vector.load %arg8[%c0_19, %c0_20] : memref<32x1xf32, #tpu.memory_space<vmem>>, vector<32x1xf32>
    %39 = vector.broadcast %38 : vector<32x1xf32> to vector<32x128xf32>
    %40 = arith.mulf %39, %37 : vector<32x128xf32>
    %cst_21 = arith.constant dense<0.000000e+00> : vector<128xf32>
    %41 = vector.multi_reduction <add>, %40, %cst_21 [0] : vector<32x128xf32> to vector<128xf32>
    %42 = vector.shape_cast %41 : vector<128xf32> to vector<1x128xf32>
    %c0_22 = arith.constant 0 : index
    %c0_23 = arith.constant 0 : index
    %43 = vector.load %arg9[%c0_22, %c0_23] : memref<1x1xf32, #tpu.memory_space<vmem>>, vector<1x1xf32>
    %44 = vector.broadcast %43 : vector<1x1xf32> to vector<1x128xf32>
    %45 = arith.addf %42, %44 : vector<1x128xf32>
    %c0_24 = arith.constant 0 : index
    %c0_25 = arith.constant 0 : index
    %46 = vector.load %arg10[%c0_24, %c0_25] : memref<1x128xf32, #tpu.memory_space<vmem>>, vector<1x128xf32>
    tpu.vector_store %arg10[%c0_24, %c0_25], %45 {strides = array<i32>} : memref<1x128xf32, #tpu.memory_space<vmem>>, vector<1x128xf32>,
    return
  }
  func.func @transform_0(%arg0: i32) -> (i32, i32) {
    %c0_i32 = arith.constant 0 : i32
    %c0_i32_0 = arith.constant 0 : i32
    return %arg0, %c0_i32 : i32, i32
  }
  func.func @transform_1(%arg0: i32) -> (i32, i32) {
    %c0_i32 = arith.constant 0 : i32
    %c0_i32_0 = arith.constant 0 : i32
    %c0_i32_1 = arith.constant 0 : i32
    return %c0_i32, %c0_i32_0 : i32, i32
  }
  func.func @transform_2(%arg0: i32) -> (i32, i32) {
    %c0_i32 = arith.constant 0 : i32
    %c0_i32_0 = arith.constant 0 : i32
    %c0_i32_1 = arith.constant 0 : i32
    return %c0_i32, %c0_i32_0 : i32, i32
  }
  func.func @transform_3(%arg0: i32) -> (i32, i32) {
    %c0_i32 = arith.constant 0 : i32
    %c0_i32_0 = arith.constant 0 : i32
    %c0_i32_1 = arith.constant 0 : i32
    return %c0_i32, %c0_i32_0 : i32, i32
  }
  func.func @transform_4(%arg0: i32) -> (i32, i32) {
    %c0_i32 = arith.constant 0 : i32
    %c0_i32_0 = arith.constant 0 : i32
    %c0_i32_1 = arith.constant 0 : i32
    return %c0_i32, %c0_i32_0 : i32, i32
  }
  func.func @transform_5(%arg0: i32) -> (i32, i32, i32) {
    %c0_i32 = arith.constant 0 : i32
    %c0_i32_0 = arith.constant 0 : i32
    %c0_i32_1 = arith.constant 0 : i32
    %c0_i32_2 = arith.constant 0 : i32
    return %c0_i32, %c0_i32_0, %c0_i32_1 : i32, i32, i32
  }
  func.func @transform_6(%arg0: i32) -> (i32, i32, i32) {
    %c0_i32 = arith.constant 0 : i32
    %c0_i32_0 = arith.constant 0 : i32
    %c0_i32_1 = arith.constant 0 : i32
    %c0_i32_2 = arith.constant 0 : i32
    return %c0_i32, %c0_i32_0, %c0_i32_1 : i32, i32, i32
  }
  func.func @transform_7(%arg0: i32) -> (i32, i32) {
    %c0_i32 = arith.constant 0 : i32
    %c0_i32_0 = arith.constant 0 : i32
    %c0_i32_1 = arith.constant 0 : i32
    return %c0_i32, %c0_i32_0 : i32, i32
  }
  func.func @transform_8(%arg0: i32) -> (i32, i32) {
    %c0_i32 = arith.constant 0 : i32
    %c0_i32_0 = arith.constant 0 : i32
    %c0_i32_1 = arith.constant 0 : i32
    return %c0_i32, %c0_i32_0 : i32, i32
  }
  func.func @transform_9(%arg0: i32) -> (i32, i32) {
    %c0_i32 = arith.constant 0 : i32
    %c0_i32_0 = arith.constant 0 : i32
    return %c0_i32, %arg0 : i32, i32
  }
}

</mosaic_0001>

<llo_original>
// kernel: tpu_custom_call.1
$region0: #{tpu_custom_call.1}
  #allocation0 [shape = 'u32[]', space=smem, size = 0x4, offset = 0x4, fixed_abs, tag = 'smem constant byte address 0x4 - core index']
  #allocation1 [shape = 'u32[72,128]{1,0:T(1,128)}', space=vmem, size = 0x9000, scoped, tag = 'internal scratch']
  #allocation2 [shape = 'f32[1,1]{1,0:T(1,128)S(1)}', space=vmem, size = 0x200, scoped, tag = 'scoped memory for tpu_custom_call.1']
  %s0 = inlined_call_operand.vmem [shape: f32[256,32], index: 0, kind: input, shape index: {}]
  %s1 = inlined_call_operand.vmem [shape: f32[32,1], index: 1, kind: input, shape index: {}]
  %s2 = inlined_call_operand.vmem [shape: f32[32,1], index: 2, kind: input, shape index: {}]
  %s3 = inlined_call_operand.vmem [shape: f32[32,32], index: 3, kind: input, shape index: {}]
  %s4 = inlined_call_operand.vmem [shape: f32[32,1], index: 4, kind: input, shape index: {}]
  %s5 = inlined_call_operand.vmem [shape: f32[2,32,32], index: 5, kind: input, shape index: {}]
  %s6 = inlined_call_operand.vmem [shape: f32[2,32,1], index: 6, kind: input, shape index: {}]
  %s7 = inlined_call_operand.vmem [shape: f32[32,1], index: 7, kind: input, shape index: {}]
  %s8 = inlined_call_operand.<no memory space> [shape: f32[1,1], index: 8, kind: input, shape index: {}]
  %s9 = inlined_call_operand.hbm [shape: f32[1,256], index: 9, kind: output, shape index: {}]
  %s10 = sld [smem:[#allocation0]]
  $region69: #{tpu_custom_call.1} parent=0
    _
  %s12 = ssub.s32 1, %s10
  %s13 = scalar_select 0, %s12, %s10
  %v14 = vstv %s8
  %15 = vst [vmem:[#allocation2] sm:$0x1] %v14
  $region1: #{tpu_custom_call.1} parent=0
    #allocation3 [shape = 'u8[1024]{0}', space=vmem, size = 0x400, scoped, tag = 'output window, operand 0']
    #allocation4 [shape = 's32[2]{0}', space=sflag, size = 0x8, scoped, tag = 'scoped memory for tpu_custom_call.1']
    %16 = vsyncpa [#allocation4], 0
    %s17 = scalar_lea.sflag [#allocation4], 1
    %18 = vsyncpa %s17, 0
    loop: start=0, step=1, limit=4
    $region2: #{tpu_custom_call.1} parent=1 // loop_pre_header
      _
    $region3: #{tpu_custom_call.1} parent=1 // loop_header
      %s20 = sphi 0, %s24
      %p21 = scmp.ge.s32.totalorder %s20, 4
      %s30 = sphi 0, %s32
      %s33 = sphi 0, %s30
      %s34 = sphi 0, %s33
      %s50 = sphi 0, %s34
      %s54 = sphi 0, %s54
      %s56 = sphi 0, %s54
      %s57 = sphi 0, %s56
      %s71 = sphi 0, %s57
      %s75 = sphi 0, %s75
      %s77 = sphi 0, %s75
      %s78 = sphi 0, %s77
      %s92 = sphi 0, %s78
      %s96 = sphi 0, %s96
      %s98 = sphi 0, %s96
      %s99 = sphi 0, %s98
      %s113 = sphi 0, %s99
      %s117 = sphi 0, %s117
      %s119 = sphi 0, %s117
      %s120 = sphi 0, %s119
      %s134 = sphi 0, %s120
      %s138 = sphi 0, %s138
      %s140 = sphi 0, %s138
      %s141 = sphi 0, %s140
      %s155 = sphi 0, %s141
      %s159 = sphi 0, %s159
      %s161 = sphi 0, %s159
      %s162 = sphi 0, %s161
      %s176 = sphi 0, %s162
      %s180 = sphi 0, %s180
      %s182 = sphi 0, %s180
      %s183 = sphi 0, %s182
      %s197 = sphi 0, %s183
      %s201 = sphi 0, %s201
      %s203 = sphi 0, %s201
      %s204 = sphi 0, %s203
      %s218 = sphi 0, %s204
      %s224 = sphi 0, %s226
      %s227 = sphi 0, %s224
      %s228 = sphi 0, %s227
      %s244 = sphi 0, %s228
    $region4: #{tpu_custom_call.1} parent=1 // loop_header_branch
      %23 = sbr.rel (%p21) target = $region8
    $region5: #{tpu_custom_call.1} parent=1 // loop_body
      %s25 = ssub.s32 %s20, 1
      %s26 = ssub.s32 %s20, 2
      %s27 = sadd.s32 %s20, 1
      %s28 = ssub.s32 %s20, %s27
      %p29 = scmp.eq.s32.totalorder %s28, 0
      %s31 = sadd.s32 %s30, 1
      %s32 = scalar_select %p29, %s30, %s31
      %p35 = pneg %p29
      %p36 = scmp.eq.s32.totalorder %s20, 1
      %p37 = por %p35, %p36
      %p38 = scmp.ne.s32.totalorder %s30, %s33
      %p39 = scmp.eq.s32.totalorder %s20, 0
      %p40 = por %p38, %p39
      %p41 = scmp.ne.s32.totalorder %s30, %s33
      %p42 = scmp.eq.s32.totalorder %s25, 1
      %p43 = por %p41, %p42
      %p44 = scmp.ne.s32.totalorder %s33, %s34
      %p45 = scmp.eq.s32.totalorder %s25, 0
      %p46 = por %p44, %p45
      %p47 = scmp.ne.s32.totalorder %s33, %s34
      %p48 = scmp.eq.s32.totalorder %s26, 1
      %p49 = por %p47, %p48
      %p51 = scmp.ne.s32.totalorder %s34, %s50
      %p52 = scmp.eq.s32.totalorder %s26, 0
      %p53 = por %p51, %p52
      %s55 = sadd.s32 %s54, 1
      %p58 = scmp.eq.s32.totalorder %s20, 1
      %p59 = scmp.ne.s32.totalorder %s54, %s56
      %p60 = scmp.eq.s32.totalorder %s20, 0
      %p61 = por %p59, %p60
      %p62 = scmp.ne.s32.totalorder %s54, %s56
      %p63 = scmp.eq.s32.totalorder %s25, 1
      %p64 = por %p62, %p63
      %p65 = scmp.ne.s32.totalorder %s56, %s57
      %p66 = scmp.eq.s32.totalorder %s25, 0
      %p67 = por %p65, %p66
      %p68 = scmp.ne.s32.totalorder %s56, %s57
      %p69 = scmp.eq.s32.totalorder %s26, 1
      %p70 = por %p68, %p69
      %p72 = scmp.ne.s32.totalorder %s57, %s71
      %p73 = scmp.eq.s32.totalorder %s26, 0
      %p74 = por %p72, %p73
      %s76 = sadd.s32 %s75, 1
      %p79 = scmp.eq.s32.totalorder %s20, 1
      %p80 = scmp.ne.s32.totalorder %s75, %s77
      %p81 = scmp.eq.s32.totalorder %s20, 0
      %p82 = por %p80, %p81
      %p83 = scmp.ne.s32.totalorder %s75, %s77
      %p84 = scmp.eq.s32.totalorder %s25, 1
      %p85 = por %p83, %p84
      %p86 = scmp.ne.s32.totalorder %s77, %s78
      %p87 = scmp.eq.s32.totalorder %s25, 0
      %p88 = por %p86, %p87
      %p89 = scmp.ne.s32.totalorder %s77, %s78
      %p90 = scmp.eq.s32.totalorder %s26, 1
      %p91 = por %p89, %p90
      %p93 = scmp.ne.s32.totalorder %s78, %s92
      %p94 = scmp.eq.s32.totalorder %s26, 0
      %p95 = por %p93, %p94
      %s97 = sadd.s32 %s96, 1
      %p100 = scmp.eq.s32.totalorder %s20, 1
      %p101 = scmp.ne.s32.totalorder %s96, %s98
      %p102 = scmp.eq.s32.totalorder %s20, 0
      %p103 = por %p101, %p102
      %p104 = scmp.ne.s32.totalorder %s96, %s98
      %p105 = scmp.eq.s32.totalorder %s25, 1
      %p106 = por %p104, %p105
      %p107 = scmp.ne.s32.totalorder %s98, %s99
      %p108 = scmp.eq.s32.totalorder %s25, 0
      %p109 = por %p107, %p108
      %p110 = scmp.ne.s32.totalorder %s98, %s99
      %p111 = scmp.eq.s32.totalorder %s26, 1
      %p112 = por %p110, %p111
      %p114 = scmp.ne.s32.totalorder %s99, %s113
      %p115 = scmp.eq.s32.totalorder %s26, 0
      %p116 = por %p114, %p115
      %s118 = sadd.s32 %s117, 1
      %p121 = scmp.eq.s32.totalorder %s20, 1
      %p122 = scmp.ne.s32.totalorder %s117, %s119
      %p123 = scmp.eq.s32.totalorder %s20, 0
      %p124 = por %p122, %p123
      %p125 = scmp.ne.s32.totalorder %s117, %s119
      %p126 = scmp.eq.s32.totalorder %s25, 1
      %p127 = por %p125, %p126
      %p128 = scmp.ne.s32.totalorder %s119, %s120
      %p129 = scmp.eq.s32.totalorder %s25, 0
      %p130 = por %p128, %p129
      %p131 = scmp.ne.s32.totalorder %s119, %s120
      %p132 = scmp.eq.s32.totalorder %s26, 1
      %p133 = por %p131, %p132
      %p135 = scmp.ne.s32.totalorder %s120, %s134
      %p136 = scmp.eq.s32.totalorder %s26, 0
      %p137 = por %p135, %p136
      %s139 = sadd.s32 %s138, 1
      %p142 = scmp.eq.s32.totalorder %s20, 1
      %p143 = scmp.ne.s32.totalorder %s138, %s140
      %p144 = scmp.eq.s32.totalorder %s20, 0
      %p145 = por %p143, %p144
      %p146 = scmp.ne.s32.totalorder %s138, %s140
      %p147 = scmp.eq.s32.totalorder %s25, 1
      %p148 = por %p146, %p147
      %p149 = scmp.ne.s32.totalorder %s140, %s141
      %p150 = scmp.eq.s32.totalorder %s25, 0
      %p151 = por %p149, %p150
      %p152 = scmp.ne.s32.totalorder %s140, %s141
      %p153 = scmp.eq.s32.totalorder %s26, 1
      %p154 = por %p152, %p153
      %p156 = scmp.ne.s32.totalorder %s141, %s155
      %p157 = scmp.eq.s32.totalorder %s26, 0
      %p158 = por %p156, %p157
      %s160 = sadd.s32 %s159, 1
      %p163 = scmp.eq.s32.totalorder %s20, 1
      %p164 = scmp.ne.s32.totalorder %s159, %s161
      %p165 = scmp.eq.s32.totalorder %s20, 0
      %p166 = por %p164, %p165
      %p167 = scmp.ne.s32.totalorder %s159, %s161
      %p168 = scmp.eq.s32.totalorder %s25, 1
      %p169 = por %p167, %p168
      %p170 = scmp.ne.s32.totalorder %s161, %s162
      %p171 = scmp.eq.s32.totalorder %s25, 0
      %p172 = por %p170, %p171
      %p173 = scmp.ne.s32.totalorder %s161, %s162
      %p174 = scmp.eq.s32.totalorder %s26, 1
      %p175 = por %p173, %p174
      %p177 = scmp.ne.s32.totalorder %s162, %s176
      %p178 = scmp.eq.s32.totalorder %s26, 0
      %p179 = por %p177, %p178
      %s181 = sadd.s32 %s180, 1
      %p184 = scmp.eq.s32.totalorder %s20, 1
      %p185 = scmp.ne.s32.totalorder %s180, %s182
      %p186 = scmp.eq.s32.totalorder %s20, 0
      %p187 = por %p185, %p186
      %p188 = scmp.ne.s32.totalorder %s180, %s182
      %p189 = scmp.eq.s32.totalorder %s25, 1
      %p190 = por %p188, %p189
      %p191 = scmp.ne.s32.totalorder %s182, %s183
      %p192 = scmp.eq.s32.totalorder %s25, 0
      %p193 = por %p191, %p192
      %p194 = scmp.ne.s32.totalorder %s182, %s183
      %p195 = scmp.eq.s32.totalorder %s26, 1
      %p196 = por %p194, %p195
      %p198 = scmp.ne.s32.totalorder %s183, %s197
      %p199 = scmp.eq.s32.totalorder %s26, 0
      %p200 = por %p198, %p199
      %s202 = sadd.s32 %s201, 1
      %p205 = scmp.eq.s32.totalorder %s20, 1
      %p206 = scmp.ne.s32.totalorder %s201, %s203
      %p207 = scmp.eq.s32.totalorder %s20, 0
      %p208 = por %p206, %p207
      %p209 = scmp.ne.s32.totalorder %s201, %s203
      %p210 = scmp.eq.s32.totalorder %s25, 1
      %p211 = por %p209, %p210
      %p212 = scmp.ne.s32.totalorder %s203, %s204
      %p213 = scmp.eq.s32.totalorder %s25, 0
      %p214 = por %p212, %p213
      %p215 = scmp.ne.s32.totalorder %s203, %s204
      %p216 = scmp.eq.s32.totalorder %s26, 1
      %p217 = por %p215, %p216
      %p219 = scmp.ne.s32.totalorder %s204, %s218
      %p220 = scmp.eq.s32.totalorder %s26, 0
      %p221 = por %p219, %p220
      %s222 = ssub.s32 %s20, %s27
      %p223 = scmp.eq.s32.totalorder %s222, 0
      %s225 = sadd.s32 %s224, 1
      %s226 = scalar_select %p223, %s224, %s225
      %p229 = pneg %p223
      %p230 = scmp.eq.s32.totalorder %s20, 1
      %p231 = por %p229, %p230
      %p232 = scmp.ne.s32.totalorder %s224, %s227
      %p233 = scmp.eq.s32.totalorder %s20, 0
      %p234 = por %p232, %p233
      %p235 = scmp.ne.s32.totalorder %s224, %s227
      %p236 = scmp.eq.s32.totalorder %s25, 1
      %p237 = por %p235, %p236
      %p238 = scmp.ne.s32.totalorder %s227, %s228
      %p239 = scmp.eq.s32.totalorder %s25, 0
      %p240 = por %p238, %p239
      %p241 = scmp.ne.s32.totalorder %s227, %s228
      %p242 = scmp.eq.s32.totalorder %s26, 1
      %p243 = por %p241, %p242
      %p245 = scmp.ne.s32.totalorder %s228, %s244
      %p246 = scmp.eq.s32.totalorder %s26, 0
      %p247 = por %p245, %p246
      %p248 = scmp.le.s32.totalorder 1, %s20
      %p249 = scmp.lt.s32.totalorder %s20, 3
      %p250 = pnand %p248, %p249
      %p251 = pneg %p250
      // Predicated region
      $region9: #{tpu_custom_call.1} parent=5 // pred_check
        _
      $region10: #{tpu_custom_call.1} parent=5 // pred_check_branch
        %253 = sbr.rel (%p250) target = $region12
      $region11: #{tpu_custom_call.1} parent=5 // pred_region
        %s254 = ssub.s32 %s20, 1
        // Predicated region
        $region13: #{tpu_custom_call.1} parent=11 // pred_check
          %p255 = pneg %p67
        $region14: #{tpu_custom_call.1} parent=11 // pred_check_branch
          %257 = sbr.rel (%p255) target = $region16
        $region15: #{tpu_custom_call.1} parent=11 // pred_region
          _
        $region16: #{tpu_custom_call.1} parent=11 // pred_fallthru
          _
        // Predicated region
        $region17: #{tpu_custom_call.1} parent=11 // pred_check
          %p258 = pneg %p88
        $region18: #{tpu_custom_call.1} parent=11 // pred_check_branch
          %260 = sbr.rel (%p258) target = $region20
        $region19: #{tpu_custom_call.1} parent=11 // pred_region
          _
        $region20: #{tpu_custom_call.1} parent=11 // pred_fallthru
          _
        // Predicated region
        $region21: #{tpu_custom_call.1} parent=11 // pred_check
          %p261 = pneg %p109
        $region22: #{tpu_custom_call.1} parent=11 // pred_check_branch
          %263 = sbr.rel (%p261) target = $region24
        $region23: #{tpu_custom_call.1} parent=11 // pred_region
          _
        $region24: #{tpu_custom_call.1} parent=11 // pred_fallthru
          _
        // Predicated region
        $region25: #{tpu_custom_call.1} parent=11 // pred_check
          %p264 = pneg %p130
        $region26: #{tpu_custom_call.1} parent=11 // pred_check_branch
          %266 = sbr.rel (%p264) target = $region28
        $region27: #{tpu_custom_call.1} parent=11 // pred_region
          _
        $region28: #{tpu_custom_call.1} parent=11 // pred_fallthru
          _
        // Predicated region
        $region29: #{tpu_custom_call.1} parent=11 // pred_check
          %p267 = pneg %p151
        $region30: #{tpu_custom_call.1} parent=11 // pred_check_branch
          %269 = sbr.rel (%p267) target = $region32
        $region31: #{tpu_custom_call.1} parent=11 // pred_region
          _
        $region32: #{tpu_custom_call.1} parent=11 // pred_fallthru
          _
        // Predicated region
        $region33: #{tpu_custom_call.1} parent=11 // pred_check
          %p270 = pneg %p172
        $region34: #{tpu_custom_call.1} parent=11 // pred_check_branch
          %272 = sbr.rel (%p270) target = $region36
        $region35: #{tpu_custom_call.1} parent=11 // pred_region
          _
        $region36: #{tpu_custom_call.1} parent=11 // pred_fallthru
          _
        // Predicated region
        $region37: #{tpu_custom_call.1} parent=11 // pred_check
          %p273 = pneg %p193
        $region38: #{tpu_custom_call.1} parent=11 // pred_check_branch
          %275 = sbr.rel (%p273) target = $region40
        $region39: #{tpu_custom_call.1} parent=11 // pred_region
          _
        $region40: #{tpu_custom_call.1} parent=11 // pred_fallthru
          _
        // Predicated region
        $region41: #{tpu_custom_call.1} parent=11 // pred_check
          %p276 = pneg %p214
        $region42: #{tpu_custom_call.1} parent=11 // pred_check_branch
          %278 = sbr.rel (%p276) target = $region44
        $region43: #{tpu_custom_call.1} parent=11 // pred_region
          _
        $region44: #{tpu_custom_call.1} parent=11 // pred_fallthru
          _
      $region12: #{tpu_custom_call.1} parent=5 // pred_fallthru
        _
      %p279 = scmp.lt.s32.totalorder %s20, 2
      // Predicated region
      $region45: #{tpu_custom_call.1} parent=5 // pred_check
        %p280 = pneg %p279
      $region46: #{tpu_custom_call.1} parent=5 // pred_check_branch
        %282 = sbr.rel (%p280) target = $region48
      $region47: #{tpu_custom_call.1} parent=5 // pred_region
        // Predicated region
        $region49: #{tpu_custom_call.1} parent=47 // pred_check
          %p283 = pneg %p40
        $region50: #{tpu_custom_call.1} parent=47 // pred_check_branch
          %285 = sbr.rel (%p283) target = $region52
        $region51: #{tpu_custom_call.1} parent=47 // pred_region
          %s286 = smul.u32 16, %s20
          %p287 = scmp.lt.s32.totalorder %s286, 31
          %s288 = scalar_select %p287, %s286, 31
          %s289 = smul.addr %s288, 8
          %s290 = scalar_lea.vmem %s0, %s289
          %s291 = smul.u32 16, %s20
        $region52: #{tpu_custom_call.1} parent=47 // pred_fallthru
          _
      $region48: #{tpu_custom_call.1} parent=5 // pred_fallthru
        _
      %p292 = scmp.le.s32.totalorder 1, %s20
      %p293 = scmp.lt.s32.totalorder %s20, 3
      %p294 = pnand %p292, %p293
      %p295 = pneg %p294
      // Predicated region
      $region53: #{tpu_custom_call.1} parent=5 // pred_check
        _
      $region54: #{tpu_custom_call.1} parent=5 // pred_check_branch
        %297 = sbr.rel (%p294) target = $region56
      $region55: #{tpu_custom_call.1} parent=5 // pred_region
        %s298 = ssub.s32 %s20, 1
        %s299 = smul.u32 16, %s25
        %p300 = scmp.lt.s32.totalorder %s299, 31
        %s301 = scalar_select %p300, %s299, 31
        %s302 = smul.addr %s301, 8
        %s303 = scalar_lea.vmem %s0, %s302
        %p304 = pneg %p46
        %p305 = pneg %p43
        %p306 = pneg %p67
        %p307 = pneg %p64
        %p308 = pneg %p88
        %p309 = pneg %p85
        %p310 = pneg %p109
        %p311 = pneg %p106
        %p312 = pneg %p130
        %p313 = pneg %p127
        %p314 = pneg %p151
        %p315 = pneg %p148
        %p316 = pneg %p172
        %p317 = pneg %p169
        %p318 = pneg %p193
        %p319 = pneg %p190
        %p320 = pneg %p214
        %p321 = pneg %p211
        %p322 = pneg %p240
        %p323 = pneg %p237
        %s324 = sand.u32 %s227, 1
        %s325 = scalar_lea.sflag [#allocation4], %s324
        %s326 = sand.u32 %s227, 1
        %s327 = scalar_lea.vmem [#allocation3], %s326
        %s328 = smul.u32 16, %s25
        %p329 = scmp.lt.s32.totalorder %s328, 31
        %s330 = scalar_select %p329, %s328, 31
        %s331 = smul.addr %s330, 8
        %s332 = scalar_lea.vmem %s0, %s331
        %s333 = smul.u32 16, %s25
        %v334 = vld [vmem:[%s1] sm:$0xff]
        %v335 = vld [vmem:[%s1 + $0x8] sm:$0xff]
        %v336 = vld [vmem:[%s1 + $0x10] sm:$0xff]
        %v337 = vld [vmem:[%s1 + $0x18] sm:$0xff]
        %v338 = vld [vmem:[%s2] sm:$0xff]
        %v339 = vld [vmem:[%s2 + $0x8] sm:$0xff]
        %v340 = vld [vmem:[%s2 + $0x10] sm:$0xff]
        %v341 = vld [vmem:[%s2 + $0x18] sm:$0xff]
        %v342 = vld [vmem:[%s332] sm:$0xff]
        %v343 = vld [vmem:[%s332 + $0x8] sm:$0xff]
        %v344 = vld [vmem:[%s332 + $0x10] sm:$0xff]
        %v345 = vld [vmem:[%s332 + $0x18] sm:$0xff]
        %v346 = vld [vmem:[%s332 + $0x20] sm:$0xff]
        %v347 = vld [vmem:[%s332 + $0x28] sm:$0xff]
        %v348 = vld [vmem:[%s332 + $0x30] sm:$0xff]
        %v349 = vld [vmem:[%s332 + $0x38] sm:$0xff]
        %v350 = vld [vmem:[%s332 + $0x40] sm:$0xff]
        %v351 = vld [vmem:[%s332 + $0x48] sm:$0xff]
        %v352 = vld [vmem:[%s332 + $0x50] sm:$0xff]
        %v353 = vld [vmem:[%s332 + $0x58] sm:$0xff]
        %v354 = vld [vmem:[%s332 + $0x60] sm:$0xff]
        %v355 = vld [vmem:[%s332 + $0x68] sm:$0xff]
        %v356 = vld [vmem:[%s332 + $0x70] sm:$0xff]
        %v357 = vld [vmem:[%s332 + $0x78] sm:$0xff]
        %v358 = vld [vmem:[%s3] sm:$0xff]
        %v359 = vld [vmem:[%s3 + $0x8] sm:$0xff]
        %v360 = vld [vmem:[%s3 + $0x10] sm:$0xff]
        %v361 = vld [vmem:[%s3 + $0x18] sm:$0xff]
        %v362 = vld [vmem:[%s4] sm:$0xff]
        %v363 = vld [vmem:[%s4 + $0x8] sm:$0xff]
        %v364 = vld [vmem:[%s4 + $0x10] sm:$0xff]
        %v365 = vld [vmem:[%s4 + $0x18] sm:$0xff]
        %367 = vset.pattern.permute.xlu0 0
        %368 = vperm.xlu0 %367, %v362
        %v369 = vpop.permute.xlu0 %368
        %372 = vset.pattern.permute.xlu0 0
        %373 = vperm.xlu0 %372, %v363
        %v374 = vpop.permute.xlu0 %373
        %377 = vset.pattern.permute.xlu0 0
        %378 = vperm.xlu0 %377, %v364
        %v379 = vpop.permute.xlu0 %378
        %382 = vset.pattern.permute.xlu0 0
        %383 = vperm.xlu0 %382, %v365
        %v384 = vpop.permute.xlu0 %383
        %vm386 = vcmask 261120
        %v388 = vsel %vm386, %v358, 0
        %v391 = vsel %vm386, %v359, 0
        %v394 = vsel %vm386, %v360, 0
        %v397 = vsel %vm386, %v361, 0
        %v400 = vsel %vm386, %v342, 0
        %v403 = vsel %vm386, %v343, 0
        %v406 = vsel %vm386, %v344, 0
        %v409 = vsel %vm386, %v345, 0
        %v412 = vsel %vm386, %v346, 0
        %v415 = vsel %vm386, %v347, 0
        %v418 = vsel %vm386, %v348, 0
        %v421 = vsel %vm386, %v349, 0
        %v424 = vsel %vm386, %v350, 0
        %v427 = vsel %vm386, %v351, 0
        %v430 = vsel %vm386, %v352, 0
        %v433 = vsel %vm386, %v353, 0
        %v436 = vsel %vm386, %v354, 0
        %v439 = vsel %vm386, %v355, 0
        %v442 = vsel %vm386, %v356, 0
        %v445 = vsel %vm386, %v357, 0
        %447 = vmatpush.xpose.msra.mxu0 %v445
        %448 = vmatpush.xpose.msra.mxu0 %v442
        %449 = vmatpush.xpose.msra.mxu0 %v439
        %450 = vmatpush.xpose.msra.mxu0 %v436
        %451 = vmatpush.xpose.msra.mxu0 %v433
        %452 = vmatpush.xpose.msra.mxu0 %v430
        %453 = vmatpush.xpose.msra.mxu0 %v427
        %454 = vmatpush.xpose.msra.mxu0 %v424
        %455 = vmatpush.xpose.msra.mxu0 %v421
        %456 = vmatpush.xpose.msra.mxu0 %v418
        %457 = vmatpush.xpose.msra.mxu0 %v415
        %458 = vmatpush.xpose.msra.mxu0 %v412
        %459 = vmatpush.xpose.msra.mxu0 %v409
        %460 = vmatpush.xpose.msra.mxu0 %v406
        %461 = vmatpush.xpose.msra.mxu0 %v403
        %462 = vmatpush.xpose.msra.mxu0 %v400
        %463 = vmatmul.f32.gmra.mxu0 %v388
        %v464 = vpop.f32.mrf.mxu0
        %v465 = vadd.f32 %v369, %v464
        %466 = vmatmul.f32.gmra.mxu0 %v391
        %v467 = vpop.f32.mrf.mxu0
        %v468 = vadd.f32 %v374, %v467
        %469 = vmatmul.f32.gmra.mxu0 %v394
        %v470 = vpop.f32.mrf.mxu0
        %v471 = vadd.f32 %v379, %v470
        %472 = vmatmul.f32.gmra.mxu0 %v397
        %v473 = vpop.f32.mrf.mxu0
        %v474 = vadd.f32 %v384, %v473
        %475 = vdwg.mxu0
        %477 = vset.pattern.permute.xlu0 0
        %478 = vperm.xlu0 %477, %v334
        %v479 = vpop.permute.xlu0 %478
        %482 = vset.pattern.permute.xlu0 0
        %483 = vperm.xlu0 %482, %v335
        %v484 = vpop.permute.xlu0 %483
        %487 = vset.pattern.permute.xlu0 0
        %488 = vperm.xlu0 %487, %v336
        %v489 = vpop.permute.xlu0 %488
        %492 = vset.pattern.permute.xlu0 0
        %493 = vperm.xlu0 %492, %v337
        %v494 = vpop.permute.xlu0 %493
        %v496 = vmax.f32 %v465, %v479
        %v497 = vmax.f32 %v468, %v484
        %v498 = vmax.f32 %v471, %v489
        %v499 = vmax.f32 %v474, %v494
        %501 = vset.pattern.permute.xlu0 0
        %502 = vperm.xlu0 %501, %v338
        %v503 = vpop.permute.xlu0 %502
        %506 = vset.pattern.permute.xlu0 0
        %507 = vperm.xlu0 %506, %v339
        %v508 = vpop.permute.xlu0 %507
        %511 = vset.pattern.permute.xlu0 0
        %512 = vperm.xlu0 %511, %v340
        %v513 = vpop.permute.xlu0 %512
        %516 = vset.pattern.permute.xlu0 0
        %517 = vperm.xlu0 %516, %v341
        %v518 = vpop.permute.xlu0 %517
        %v520 = vmin.f32 %v496, %v503
        %v521 = vmin.f32 %v497, %v508
        %v522 = vmin.f32 %v498, %v513
        %v523 = vmin.f32 %v499, %v518
        %v524 = vld [vmem:[%s5] sm:$0xff]
        %v525 = vld [vmem:[%s5 + $0x8] sm:$0xff]
        %v526 = vld [vmem:[%s5 + $0x10] sm:$0xff]
        %v527 = vld [vmem:[%s5 + $0x18] sm:$0xff]
        %v528 = vld [vmem:[%s6] sm:$0xff]
        %v529 = vld [vmem:[%s6 + $0x8] sm:$0xff]
        %v530 = vld [vmem:[%s6 + $0x10] sm:$0xff]
        %v531 = vld [vmem:[%s6 + $0x18] sm:$0xff]
        %533 = vset.pattern.permute.xlu0 0
        %534 = vperm.xlu0 %533, %v528
        %v535 = vpop.permute.xlu0 %534
        %538 = vset.pattern.permute.xlu0 0
        %539 = vperm.xlu0 %538, %v529
        %v540 = vpop.permute.xlu0 %539
        %543 = vset.pattern.permute.xlu0 0
        %544 = vperm.xlu0 %543, %v530
        %v545 = vpop.permute.xlu0 %544
        %548 = vset.pattern.permute.xlu0 0
        %549 = vperm.xlu0 %548, %v531
        %v550 = vpop.permute.xlu0 %549
        %v553 = vsel %vm386, %v524, 0
        %v556 = vsel %vm386, %v525, 0
        %v559 = vsel %vm386, %v526, 0
        %v562 = vsel %vm386, %v527, 0
        %564 = vmatpush.msra.mxu0 0.0
        %565 = vmatpush.msra.mxu0 0.0
        %566 = vmatpush.msra.mxu0 0.0
        %567 = vmatpush.msra.mxu0 0.0
        %568 = vmatpush.msra.mxu0 0.0
        %569 = vmatpush.msra.mxu0 0.0
        %570 = vmatpush.msra.mxu0 0.0
        %571 = vmatpush.msra.mxu0 0.0
        %572 = vmatpush.msra.mxu0 0.0
        %573 = vmatpush.msra.mxu0 0.0
        %574 = vmatpush.msra.mxu0 0.0
        %575 = vmatpush.msra.mxu0 0.0
        %576 = vmatpush.msra.mxu0 %v523
        %577 = vmatpush.msra.mxu0 %v522
        %578 = vmatpush.msra.mxu0 %v521
        %579 = vmatpush.msra.mxu0 %v520
        %580 = vmatmul.f32.gmra.mxu0 %v553
        %v581 = vpop.f32.mrf.mxu0
        %v582 = vadd.f32 %v535, %v581
        %583 = vmatmul.f32.gmra.mxu0 %v556
        %v584 = vpop.f32.mrf.mxu0
        %v585 = vadd.f32 %v540, %v584
        %586 = vmatmul.f32.gmra.mxu0 %v559
        %v587 = vpop.f32.mrf.mxu0
        %v588 = vadd.f32 %v545, %v587
        %589 = vmatmul.f32.gmra.mxu0 %v562
        %v590 = vpop.f32.mrf.mxu0
        %v591 = vadd.f32 %v550, %v590
        %592 = vdwg.mxu0
        %v593 = vmax.f32 %v582, %v479
        %v594 = vmax.f32 %v585, %v484
        %v595 = vmax.f32 %v588, %v489
        %v596 = vmax.f32 %v591, %v494
        %v597 = vmin.f32 %v593, %v503
        %v598 = vmin.f32 %v594, %v508
        %v599 = vmin.f32 %v595, %v513
        %v600 = vmin.f32 %v596, %v518
        %s601 = scalar_lea.vmem %s5, 32
        %v602 = vld [vmem:[%s601] sm:$0xff]
        %v603 = vld [vmem:[%s601 + $0x8] sm:$0xff]
        %v604 = vld [vmem:[%s601 + $0x10] sm:$0xff]
        %v605 = vld [vmem:[%s601 + $0x18] sm:$0xff]
        %s606 = scalar_lea.vmem %s6, 32
        %v607 = vld [vmem:[%s606] sm:$0xff]
        %v608 = vld [vmem:[%s606 + $0x8] sm:$0xff]
        %v609 = vld [vmem:[%s606 + $0x10] sm:$0xff]
        %v610 = vld [vmem:[%s606 + $0x18] sm:$0xff]
        %612 = vset.pattern.permute.xlu0 0
        %613 = vperm.xlu0 %612, %v607
        %v614 = vpop.permute.xlu0 %613
        %617 = vset.pattern.permute.xlu0 0
        %618 = vperm.xlu0 %617, %v608
        %v619 = vpop.permute.xlu0 %618
        %622 = vset.pattern.permute.xlu0 0
        %623 = vperm.xlu0 %622, %v609
        %v624 = vpop.permute.xlu0 %623
        %627 = vset.pattern.permute.xlu0 0
        %628 = vperm.xlu0 %627, %v610
        %v629 = vpop.permute.xlu0 %628
        %v632 = vsel %vm386, %v602, 0
        %v635 = vsel %vm386, %v603, 0
        %v638 = vsel %vm386, %v604, 0
        %v641 = vsel %vm386, %v605, 0
        %643 = vmatpush.msra.mxu0 0.0
        %644 = vmatpush.msra.mxu0 0.0
        %645 = vmatpush.msra.mxu0 0.0
        %646 = vmatpush.msra.mxu0 0.0
        %647 = vmatpush.msra.mxu0 0.0
        %648 = vmatpush.msra.mxu0 0.0
        %649 = vmatpush.msra.mxu0 0.0
        %650 = vmatpush.msra.mxu0 0.0
        %651 = vmatpush.msra.mxu0 0.0
        %652 = vmatpush.msra.mxu0 0.0
        %653 = vmatpush.msra.mxu0 0.0
        %654 = vmatpush.msra.mxu0 0.0
        %655 = vmatpush.msra.mxu0 %v600
        %656 = vmatpush.msra.mxu0 %v599
        %657 = vmatpush.msra.mxu0 %v598
        %658 = vmatpush.msra.mxu0 %v597
        %659 = vmatmul.f32.gmra.mxu0 %v632
        %v660 = vpop.f32.mrf.mxu0
        %v661 = vadd.f32 %v614, %v660
        %662 = vmatmul.f32.gmra.mxu0 %v635
        %v663 = vpop.f32.mrf.mxu0
        %v664 = vadd.f32 %v619, %v663
        %665 = vmatmul.f32.gmra.mxu0 %v638
        %v666 = vpop.f32.mrf.mxu0
        %v667 = vadd.f32 %v624, %v666
        %668 = vmatmul.f32.gmra.mxu0 %v641
        %v669 = vpop.f32.mrf.mxu0
        %v670 = vadd.f32 %v629, %v669
        %671 = vdwg.mxu0
        %v672 = vmax.f32 %v661, %v479
        %v673 = vmax.f32 %v664, %v484
        %v674 = vmax.f32 %v667, %v489
        %v675 = vmax.f32 %v670, %v494
        %v676 = vmin.f32 %v672, %v503
        %v677 = vmin.f32 %v673, %v508
        %v678 = vmin.f32 %v674, %v513
        %v679 = vmin.f32 %v675, %v518
        %v680 = vld [vmem:[%s7] sm:$0xff]
        %v681 = vld [vmem:[%s7 + $0x8] sm:$0xff]
        %v682 = vld [vmem:[%s7 + $0x10] sm:$0xff]
        %v683 = vld [vmem:[%s7 + $0x18] sm:$0xff]
        %685 = vset.pattern.permute.xlu0 0
        %686 = vperm.xlu0 %685, %v680
        %v687 = vpop.permute.xlu0 %686
        %690 = vset.pattern.permute.xlu0 0
        %691 = vperm.xlu0 %690, %v681
        %v692 = vpop.permute.xlu0 %691
        %695 = vset.pattern.permute.xlu0 0
        %696 = vperm.xlu0 %695, %v682
        %v697 = vpop.permute.xlu0 %696
        %700 = vset.pattern.permute.xlu0 0
        %701 = vperm.xlu0 %700, %v683
        %v702 = vpop.permute.xlu0 %701
        %v704 = vmul.f32 %v687, %v676
        %v705 = vmul.f32 %v692, %v677
        %v706 = vmul.f32 %v697, %v678
        %v707 = vmul.f32 %v702, %v679
        %v708 = vadd.f32 %v704, %v705
        %v709 = vadd.f32 %v708, %v706
        %v710 = vadd.f32 %v709, %v707
        %v711 = vrot.slane %v710, 4
        %v712 = vadd.f32 %v710, %v711
        %v713 = vrot.slane %v712, 2
        %v714 = vadd.f32 %v712, %v713
        %v715 = vrot.slane %v714, 1
        %v716 = vadd.f32 %v714, %v715
        %v717 = vld [vmem:[#allocation2] sm:$0x1]
        %719 = vset.pattern.permute.xlu0 0
        %720 = vperm.xlu0 %719, %v717
        %v721 = vpop.permute.xlu0 %720
        %v723 = vperm.slane %v721, 0
        %v724 = vadd.f32 %v716, %v723
        %725 = vst [vmem:[%s327] sm:$0x1] %v724
        %s726 = sand.u32 %s227, 1
        %s727 = scalar_lea.sflag [#allocation4], %s726
        %s728 = sand.u32 %s227, 1
        %s729 = scalar_lea.vmem [#allocation3], %s728
        // Predicated region
        $region57: #{tpu_custom_call.1} parent=55 // pred_check
          %p730 = pneg %p237
        $region58: #{tpu_custom_call.1} parent=55 // pred_check_branch
          %732 = sbr.rel (%p730) target = $region60
        $region59: #{tpu_custom_call.1} parent=55 // pred_region
          %734 = vsyncadd %s727, 0
          %s735 = scalar_lea.hbm %s9, %s25
          %s737 = sshll.u32 %s729, 4
          %s738 = int_to_ptr.vmem [resolvable:$true] %s737
          %s739 = sshll.u32 %s735, 4
          %s740 = int_to_ptr.hbm [resolvable:$true] %s739
          %742 = dma.vmem_to_hbm [thread:$0]  %s738, 16, %s740, %s727
        $region60: #{tpu_custom_call.1} parent=55 // pred_fallthru
          _
      $region56: #{tpu_custom_call.1} parent=5 // pred_fallthru
        _
      %p743 = scmp.le.s32.totalorder 2, %s20
      // Predicated region
      $region61: #{tpu_custom_call.1} parent=5 // pred_check
        %p744 = pneg %p743
      $region62: #{tpu_custom_call.1} parent=5 // pred_check_branch
        %746 = sbr.rel (%p744) target = $region64
      $region63: #{tpu_custom_call.1} parent=5 // pred_region
        %s747 = ssub.s32 %s20, 2
        // Predicated region
        $region65: #{tpu_custom_call.1} parent=63 // pred_check
          %p748 = pneg %p243
        $region66: #{tpu_custom_call.1} parent=63 // pred_check_branch
          %750 = sbr.rel (%p748) target = $region68
        $region67: #{tpu_custom_call.1} parent=63 // pred_region
          %s751 = sand.u32 %s228, 1
          %s752 = scalar_lea.sflag [#allocation4], %s751
          %s753 = sand.u32 %s228, 1
          %s754 = scalar_lea.vmem [#allocation3], %s753
          %756 = dma.done %s752, 16
        $region68: #{tpu_custom_call.1} parent=63 // pred_fallthru
          _
      $region64: #{tpu_custom_call.1} parent=5 // pred_fallthru
        _
    $region6: #{tpu_custom_call.1} parent=1 // loop_footer
      %s24 = sadd.s32 1, %s20
    $region7: #{tpu_custom_call.1} parent=1 // loop_footer_branch
      %19 = sbr.rel target = $region3
    $region8: #{tpu_custom_call.1} parent=1 // loop_exit
      _
    %757 = vsyncpa [#allocation4], 1
    %s758 = scalar_lea.sflag [#allocation4], 1
    %759 = vsyncpa %s758, 1

</llo_original>
